<compile_context>
chip_gen: v5e
topology: v5e:2x2
jax: 0.10.0
libtpu: 0.0.40
codegen_flags: <defaults>
</compile_context>

<pallas_src>
import jax
import jax.numpy as jnp
from jax.experimental import pallas as pl
from jax.experimental.pallas import tpu as pltpu


def _round_up(n, m):
    return ((n + m - 1) // m) * m


def qnetwork_kernel(x_ref, w1_ref, b1_ref, w2_ref, b2_ref, w3_ref, b3_ref, o_ref):
    """Fused per-batch-tile MLP: relu(xW1+b1) -> relu(.W2+b2) -> .W3+b3."""
    x = x_ref[...].astype(jnp.bfloat16)                       # bf16 MXU operand
    h1 = jnp.dot(x, w1_ref[...], preferred_element_type=jnp.float32) + b1_ref[...]
    h1 = jnp.maximum(h1, 0.0).astype(jnp.bfloat16)            # ReLU in f32, cast for MXU
    h2 = jnp.dot(h1, w2_ref[...], preferred_element_type=jnp.float32) + b2_ref[...]
    h2 = jnp.maximum(h2, 0.0).astype(jnp.bfloat16)
    q = jnp.dot(h2, w3_ref[...], preferred_element_type=jnp.float32) + b3_ref[...]
    o_ref[...] = q.astype(o_ref.dtype)


@jax.jit
def qnetwork_forward(x, params):
    """x: [B, state_dim] float32.

    params: dict with weights stored [in, out] (transposed vs PyTorch) and
    biases [1, out] f32. Returns [B, action_dim] float32 Q-values.
    """
    w1, b1 = params["w1"], params["b1"]
    w2, b2 = params["w2"], params["b2"]
    w3, b3 = params["w3"], params["b3"]

    B, state_dim = x.shape
    hidden_dim = w1.shape[1]
    action_dim = w3.shape[1]

    # Batch tile selection:
    #  - B < 32: single tile, rounded up to the 8-sublane granule.
    #  - B >= 32: ~ceil(B/2) so the grid has >= 2 steps (keeps both v7x
    #    TensorCores busy), capped at 1024 so huge batches still use few,
    #    fat steps (per-step overhead ~0.35 us; weights already resident).
    MAX_TM = 1024
    if B >= 32:
        TM = min(MAX_TM, _round_up(-(-B // 2), 8))
    else:
        TM = _round_up(B, 8)
    grid = (pl.cdiv(B, TM),)

    # Weights/biases: one block, constant index_map -> DMA'd once, VMEM-resident.
    const = lambda a: pl.BlockSpec(a.shape, lambda i: (0,) * a.ndim)

    flops = 2 * B * (state_dim * hidden_dim
                     + hidden_dim * hidden_dim
                     + hidden_dim * action_dim)
    bytes_accessed = (
        B * state_dim * x.dtype.itemsize
        + B * action_dim * 4
        + sum(p.size * p.dtype.itemsize for p in params.values())
    )
    cost = pl.CostEstimate(flops=flops, transcendentals=0,
                           bytes_accessed=bytes_accessed)

    out = pl.pallas_call(
        qnetwork_kernel,
        out_shape=jax.ShapeDtypeStruct((B, action_dim), jnp.float32),
        grid=grid,
        in_specs=[
            pl.BlockSpec((TM, state_dim), lambda i: (i, 0)),   # x: tiled over batch
            const(w1), const(b1),
            const(w2), const(b2),
            const(w3), const(b3),
        ],
        out_specs=pl.BlockSpec((TM, action_dim), lambda i: (i, 0)),
        compiler_params=pltpu.CompilerParams(
            dimension_semantics=("parallel",)),                # shard batch across TCs
        cost_estimate=cost,
    )(x, w1, b1, w2, b2, w3, b3)

    return out


def init_params(key, state_dim, action_dim, hidden_dim=128,
                weight_dtype=jnp.bfloat16):
    """Mimics nn.Linear's U(-1/sqrt(fan_in), 1/sqrt(fan_in)) init.

    Weights are stored [in, out] (transposed vs PyTorch) in `weight_dtype`
    (bf16 by default: half the weight HBM bytes, native MXU path); biases are
    [1, out] f32.
    """
    ks = jax.random.split(key, 6)

    def linear(kw, kb, fan_in, fan_out):
        bound = 1.0 / jnp.sqrt(fan_in)
        w = jax.random.uniform(kw, (fan_in, fan_out), jnp.float32, -bound, bound)
        b = jax.random.uniform(kb, (1, fan_out), jnp.float32, -bound, bound)
        return w.astype(weight_dtype), b

    w1, b1 = linear(ks[0], ks[1], state_dim, hidden_dim)
    w2, b2 = linear(ks[2], ks[3], hidden_dim, hidden_dim)
    w3, b3 = linear(ks[4], ks[5], hidden_dim, action_dim)
    return {"w1": w1, "b1": b1, "w2": w2, "b2": b2, "w3": w3, "b3": b3}


def reference_forward(x, params):
    """Pure-JAX reference doing the same bf16-input / f32-accumulate math."""
    h1 = jnp.maximum(
        jnp.dot(x.astype(jnp.bfloat16), params["w1"],
                preferred_element_type=jnp.float32) + params["b1"], 0.0)
    h2 = jnp.maximum(
        jnp.dot(h1.astype(jnp.bfloat16), params["w2"],
                preferred_element_type=jnp.float32) + params["b2"], 0.0)
    return jnp.dot(h2.astype(jnp.bfloat16), params["w3"],
                   preferred_element_type=jnp.float32) + params["b3"]


if __name__ == "__main__":
    state_dim, action_dim, hidden_dim = 8, 4, 128
    batch = 2

    key = jax.random.PRNGKey(0)
    k_x, k_p, k_x2 = jax.random.split(key, 3)
    params = init_params(k_p, state_dim, action_dim, hidden_dim)

    # Small-batch check (online action-selection shape): single partial block.
    x = jax.random.normal(k_x, (batch, state_dim), jnp.float32)
    out = qnetwork_forward(x, params)
    jax.block_until_ready(out)
    ref = reference_forward(x, params)
    assert out.shape == (batch, action_dim)
    assert jnp.allclose(out, ref, atol=1e-3, rtol=1e-3)

    # Multi-tile check: B=300 -> TM=152 -> 2 grid steps with a partial last
    # block (exercises the batch grid + boundary masking path).
    x2 = jax.random.normal(k_x2, (300, state_dim), jnp.float32)
    out2 = qnetwork_forward(x2, params)
    jax.block_until_ready(out2)
    ref2 = reference_forward(x2, params)
    assert out2.shape == (300, action_dim)
    assert jnp.allclose(out2, ref2, atol=1e-3, rtol=1e-3)

    print("KERNEL_OK")
</pallas_src>

<mosaic_0001>
module attributes {stable_mosaic.version = 11 : i64} {
  func.func @qnetwork_kernel(%arg0: i32, %arg1: memref<8x8xf32, #tpu.memory_space<vmem>>, %arg2: memref<8x128xbf16, #tpu.memory_space<vmem>>, %arg3: memref<1x128xf32, #tpu.memory_space<vmem>>, %arg4: memref<128x128xbf16, #tpu.memory_space<vmem>>, %arg5: memref<1x128xf32, #tpu.memory_space<vmem>>, %arg6: memref<128x4xbf16, #tpu.memory_space<vmem>>, %arg7: memref<1x4xf32, #tpu.memory_space<vmem>>, %arg8: memref<8x4xf32, #tpu.memory_space<vmem>>) attributes {dimension_semantics = [#tpu.dimension_semantics<parallel>], iteration_bounds = array<i64: 1>, scalar_prefetch = 0 : i64, scratch_operands = 0 : i64, tpu.core_type = #tpu.core_type<tc>, window_params = [{transform_indices = @transform_0, window_bounds = array<i64: 8, 8>}, {pipeline_mode = #tpu.pipeline_mode<synchronous>, transform_indices = @transform_1, window_bounds = array<i64: 8, 128>}, {pipeline_mode = #tpu.pipeline_mode<synchronous>, transform_indices = @transform_2, window_bounds = array<i64: 1, 128>}, {pipeline_mode = #tpu.pipeline_mode<synchronous>, transform_indices = @transform_3, window_bounds = array<i64: 128, 128>}, {pipeline_mode = #tpu.pipeline_mode<synchronous>, transform_indices = @transform_4, window_bounds = array<i64: 1, 128>}, {pipeline_mode = #tpu.pipeline_mode<synchronous>, transform_indices = @transform_5, window_bounds = array<i64: 128, 4>}, {pipeline_mode = #tpu.pipeline_mode<synchronous>, transform_indices = @transform_6, window_bounds = array<i64: 1, 4>}, {transform_indices = @transform_7, window_bounds = array<i64: 8, 4>}]} {
    %c0 = arith.constant 0 : index
    %c0_0 = arith.constant 0 : index
    %0 = vector.load %arg1[%c0, %c0_0] : memref<8x8xf32, #tpu.memory_space<vmem>>, vector<8x8xf32>
    %1 = arith.truncf %0 : vector<8x8xf32> to vector<8x8xbf16>
    %c0_1 = arith.constant 0 : index
    %c0_2 = arith.constant 0 : index
    %2 = vector.load %arg2[%c0_1, %c0_2] : memref<8x128xbf16, #tpu.memory_space<vmem>>, vector<8x128xbf16>
    %cst = arith.constant dense<0.000000e+00> : vector<8x128xf32>
    %3 = tpu.matmul %1, %2, %cst {dimension_numbers = #tpu.dot_dimension_numbers<[1], [0], [0], [1], [0, 0, 1, 1], [], []>} : vector<8x8xbf16>, vector<8x128xbf16>, vector<8x128xf32> -> vector<8x128xf32>
    %c0_3 = arith.constant 0 : index
    %c0_4 = arith.constant 0 : index
    %4 = vector.load %arg3[%c0_3, %c0_4] : memref<1x128xf32, #tpu.memory_space<vmem>>, vector<1x128xf32>
    %5 = vector.broadcast %4 : vector<1x128xf32> to vector<8x128xf32>
    %6 = arith.addf %3, %5 : vector<8x128xf32>
    %cst_5 = arith.constant 0.000000e+00 : f32
    %7 = vector.broadcast %cst_5 : f32 to vector<8x128xf32>
    %8 = arith.maximumf %6, %7 : vector<8x128xf32>
    %9 = arith.truncf %8 : vector<8x128xf32> to vector<8x128xbf16>
    %c0_6 = arith.constant 0 : index
    %c0_7 = arith.constant 0 : index
    %10 = vector.load %arg4[%c0_6, %c0_7] : memref<128x128xbf16, #tpu.memory_space<vmem>>, vector<128x128xbf16>
    %cst_8 = arith.constant dense<0.000000e+00> : vector<8x128xf32>
    %11 = tpu.matmul %9, %10, %cst_8 {dimension_numbers = #tpu.dot_dimension_numbers<[1], [0], [0], [1], [0, 0, 1, 1], [], []>} : vector<8x128xbf16>, vector<128x128xbf16>, vector<8x128xf32> -> vector<8x128xf32>
    %c0_9 = arith.constant 0 : index
    %c0_10 = arith.constant 0 : index
    %12 = vector.load %arg5[%c0_9, %c0_10] : memref<1x128xf32, #tpu.memory_space<vmem>>, vector<1x128xf32>
    %13 = vector.broadcast %12 : vector<1x128xf32> to vector<8x128xf32>
    %14 = arith.addf %11, %13 : vector<8x128xf32>
    %cst_11 = arith.constant 0.000000e+00 : f32
    %15 = vector.broadcast %cst_11 : f32 to vector<8x128xf32>
    %16 = arith.maximumf %14, %15 : vector<8x128xf32>
    %17 = arith.truncf %16 : vector<8x128xf32> to vector<8x128xbf16>
    %c0_12 = arith.constant 0 : index
    %c0_13 = arith.constant 0 : index
    %18 = vector.load %arg6[%c0_12, %c0_13] : memref<128x4xbf16, #tpu.memory_space<vmem>>, vector<128x4xbf16>
    %cst_14 = arith.constant dense<0.000000e+00> : vector<8x4xf32>
    %19 = tpu.matmul %17, %18, %cst_14 {dimension_numbers = #tpu.dot_dimension_numbers<[1], [0], [0], [1], [0, 0, 1, 1], [], []>} : vector<8x128xbf16>, vector<128x4xbf16>, vector<8x4xf32> -> vector<8x4xf32>
    %c0_15 = arith.constant 0 : index
    %c0_16 = arith.constant 0 : index
    %20 = vector.load %arg7[%c0_15, %c0_16] : memref<1x4xf32, #tpu.memory_space<vmem>>, vector<1x4xf32>
    %21 = vector.broadcast %20 : vector<1x4xf32> to vector<8x4xf32>
    %22 = arith.addf %19, %21 : vector<8x4xf32>
    %c0_17 = arith.constant 0 : index
    %c0_18 = arith.constant 0 : index
    %23 = vector.load %arg8[%c0_17, %c0_18] : memref<8x4xf32, #tpu.memory_space<vmem>>, vector<8x4xf32>
    tpu.vector_store %arg8[%c0_17, %c0_18], %22 {strides = array<i32>} : memref<8x4xf32, #tpu.memory_space<vmem>>, vector<8x4xf32>,
    return
  }
  func.func @transform_0(%arg0: i32) -> (i32, i32) {
    %c0_i32 = arith.constant 0 : i32
    %c0_i32_0 = arith.constant 0 : i32
    return %arg0, %c0_i32 : i32, i32
  }
  func.func @transform_1(%arg0: i32) -> (i32, i32) {
    %c0_i32 = arith.constant 0 : i32
    %c0_i32_0 = arith.constant 0 : i32
    %c0_i32_1 = arith.constant 0 : i32
    return %c0_i32, %c0_i32_0 : i32, i32
  }
  func.func @transform_2(%arg0: i32) -> (i32, i32) {
    %c0_i32 = arith.constant 0 : i32
    %c0_i32_0 = arith.constant 0 : i32
    %c0_i32_1 = arith.constant 0 : i32
    return %c0_i32, %c0_i32_0 : i32, i32
  }
  func.func @transform_3(%arg0: i32) -> (i32, i32) {
    %c0_i32 = arith.constant 0 : i32
    %c0_i32_0 = arith.constant 0 : i32
    %c0_i32_1 = arith.constant 0 : i32
    return %c0_i32, %c0_i32_0 : i32, i32
  }
  func.func @transform_4(%arg0: i32) -> (i32, i32) {
    %c0_i32 = arith.constant 0 : i32
    %c0_i32_0 = arith.constant 0 : i32
    %c0_i32_1 = arith.constant 0 : i32
    return %c0_i32, %c0_i32_0 : i32, i32
  }
  func.func @transform_5(%arg0: i32) -> (i32, i32) {
    %c0_i32 = arith.constant 0 : i32
    %c0_i32_0 = arith.constant 0 : i32
    %c0_i32_1 = arith.constant 0 : i32
    return %c0_i32, %c0_i32_0 : i32, i32
  }
  func.func @transform_6(%arg0: i32) -> (i32, i32) {
    %c0_i32 = arith.constant 0 : i32
    %c0_i32_0 = arith.constant 0 : i32
    %c0_i32_1 = arith.constant 0 : i32
    return %c0_i32, %c0_i32_0 : i32, i32
  }
  func.func @transform_7(%arg0: i32) -> (i32, i32) {
    %c0_i32 = arith.constant 0 : i32
    %c0_i32_0 = arith.constant 0 : i32
    return %arg0, %c0_i32 : i32, i32
  }
}

</mosaic_0001>

<llo_original>
// kernel: qnetwork_forward.1
$region0: #{qnetwork_forward.1}
  #allocation0 [shape = 'u32[]', space=smem, size = 0x4, offset = 0x4, fixed_abs, tag = 'smem constant byte address 0x4 - core index']
  #allocation1 [shape = 'u32[72,128]{1,0:T(1,128)}', space=vmem, size = 0x9000, scoped, tag = 'internal scratch']
  %s0 = inlined_call_operand.hbm [shape: f32[2,8], index: 0, kind: input, shape index: {}]
  %s1 = inlined_call_operand.vmem [shape: bf16[8,128], index: 1, kind: input, shape index: {}]
  %s2 = inlined_call_operand.vmem [shape: f32[1,128], index: 2, kind: input, shape index: {}]
  %s3 = inlined_call_operand.vmem [shape: bf16[128,128], index: 3, kind: input, shape index: {}]
  %s4 = inlined_call_operand.hbm [shape: f32[1,128], index: 4, kind: input, shape index: {}]
  %s5 = inlined_call_operand.vmem [shape: bf16[128,4], index: 5, kind: input, shape index: {}]
  %s6 = inlined_call_operand.hbm [shape: f32[1,4], index: 6, kind: input, shape index: {}]
  %s7 = inlined_call_operand.hbm [shape: f32[2,4], index: 7, kind: output, shape index: {}]
  %s8 = sld [smem:[#allocation0]]
  $region50: #{qnetwork_forward.1} parent=0
    _
  %s10 = ssub.s32 1, %s8
  %s11 = scalar_select 0, %s10, %s8
  $region1: #{qnetwork_forward.1} parent=0
    #allocation2 [shape = 'u8[4096]{0}', space=vmem, size = 0x1000, scoped, tag = 'input window, operand 0, single buffered']
    #allocation3 [shape = 's32[1]{0}', space=sflag, size = 0x4, scoped, tag = 'scoped memory for qnetwork_forward.1']
    #allocation4 [shape = 's32[1]{0}', space=sflag, size = 0x4, scoped, tag = 'scoped memory for qnetwork_forward.1']
    #allocation5 [shape = 'u8[512]{0}', space=vmem, size = 0x400, scoped, tag = 'input window, operand 4, single buffered']
    #allocation6 [shape = 's32[1]{0}', space=sflag, size = 0x4, scoped, tag = 'scoped memory for qnetwork_forward.1']
    #allocation7 [shape = 'u8[512]{0}', space=vmem, size = 0x400, scoped, tag = 'input window, operand 6, single buffered']
    #allocation8 [shape = 'u8[4096]{0}', space=vmem, size = 0x1000, scoped, tag = 'output window, operand 0, single buffered']
    %12 = vsyncpa [#allocation3], 0
    %13 = vsyncpa [#allocation6], 0
    %14 = vsyncpa [#allocation4], 0
    // Predicated region
    $region2: #{qnetwork_forward.1} parent=1 // pred_check
      _
    $region3: #{qnetwork_forward.1} parent=1 // pred_check_branch
      %16 = sbr.rel (0) target = $region5
    $region4: #{qnetwork_forward.1} parent=1 // pred_region
      %18 = vsyncadd [#allocation3], 96
      %s19 = sshll.u32 %s0, 4
      %s20 = int_to_ptr.hbm [resolvable:$true] %s19
      %s21 = sshll.u32 [#allocation2], 4
      %s22 = int_to_ptr.vmem [resolvable:$true] %s21
      %27 = dma.hbm_to_vmem [thread:$0]  %s20, 32, %s22, [#allocation3], 32, 32, 2
    $region5: #{qnetwork_forward.1} parent=1 // pred_fallthru
      _
    // Predicated region
    $region6: #{qnetwork_forward.1} parent=1 // pred_check
      _
    $region7: #{qnetwork_forward.1} parent=1 // pred_check_branch
      %29 = sbr.rel (0) target = $region9
    $region8: #{qnetwork_forward.1} parent=1 // pred_region
      _
    $region9: #{qnetwork_forward.1} parent=1 // pred_fallthru
      _
    // Predicated region
    $region10: #{qnetwork_forward.1} parent=1 // pred_check
      _
    $region11: #{qnetwork_forward.1} parent=1 // pred_check_branch
      %31 = sbr.rel (0) target = $region13
    $region12: #{qnetwork_forward.1} parent=1 // pred_region
      _
    $region13: #{qnetwork_forward.1} parent=1 // pred_fallthru
      _
    // Predicated region
    $region14: #{qnetwork_forward.1} parent=1 // pred_check
      _
    $region15: #{qnetwork_forward.1} parent=1 // pred_check_branch
      %33 = sbr.rel (0) target = $region17
    $region16: #{qnetwork_forward.1} parent=1 // pred_region
      _
    $region17: #{qnetwork_forward.1} parent=1 // pred_fallthru
      _
    // Predicated region
    $region18: #{qnetwork_forward.1} parent=1 // pred_check
      _
    $region19: #{qnetwork_forward.1} parent=1 // pred_check_branch
      %35 = sbr.rel (0) target = $region21
    $region20: #{qnetwork_forward.1} parent=1 // pred_region
      %37 = vsyncadd [#allocation6], 0
      %s39 = sshll.u32 %s4, 4
      %s40 = int_to_ptr.hbm [resolvable:$true] %s39
      %s41 = sshll.u32 [#allocation5], 4
      %s42 = int_to_ptr.vmem [resolvable:$true] %s41
      %44 = dma.hbm_to_vmem [thread:$0]  %s40, 16, %s42, [#allocation6]
    $region21: #{qnetwork_forward.1} parent=1 // pred_fallthru
      _
    // Predicated region
    $region22: #{qnetwork_forward.1} parent=1 // pred_check
      _
    $region23: #{qnetwork_forward.1} parent=1 // pred_check_branch
      %46 = sbr.rel (0) target = $region25
    $region24: #{qnetwork_forward.1} parent=1 // pred_region
      _
    $region25: #{qnetwork_forward.1} parent=1 // pred_fallthru
      _
    // Predicated region
    $region26: #{qnetwork_forward.1} parent=1 // pred_check
      _
    $region27: #{qnetwork_forward.1} parent=1 // pred_check_branch
      %48 = sbr.rel (0) target = $region29
    $region28: #{qnetwork_forward.1} parent=1 // pred_region
      %50 = vsyncadd [#allocation6], 0
      %s52 = sshll.u32 %s6, 4
      %s53 = int_to_ptr.hbm [resolvable:$true] %s52
      %s54 = sshll.u32 [#allocation7], 4
      %s55 = int_to_ptr.vmem [resolvable:$true] %s54
      %57 = dma.hbm_to_vmem [thread:$0]  %s53, 16, %s55, [#allocation6]
    $region29: #{qnetwork_forward.1} parent=1 // pred_fallthru
      _
    // Predicated region
    $region30: #{qnetwork_forward.1} parent=1 // pred_check
      _
    $region31: #{qnetwork_forward.1} parent=1 // pred_check_branch
      %59 = sbr.rel (0) target = $region33
    $region32: #{qnetwork_forward.1} parent=1 // pred_region
      %61 = dma.done [#allocation3], 128
    $region33: #{qnetwork_forward.1} parent=1 // pred_fallthru
      _
    // Predicated region
    $region34: #{qnetwork_forward.1} parent=1 // pred_check
      _
    $region35: #{qnetwork_forward.1} parent=1 // pred_check_branch
      %63 = sbr.rel (0) target = $region37
    $region36: #{qnetwork_forward.1} parent=1 // pred_region
      %65 = dma.done [#allocation6], 16
    $region37: #{qnetwork_forward.1} parent=1 // pred_fallthru
      _
    // Predicated region
    $region38: #{qnetwork_forward.1} parent=1 // pred_check
      _
    $region39: #{qnetwork_forward.1} parent=1 // pred_check_branch
      %67 = sbr.rel (0) target = $region41
    $region40: #{qnetwork_forward.1} parent=1 // pred_region
      %69 = dma.done [#allocation6], 16
    $region41: #{qnetwork_forward.1} parent=1 // pred_fallthru
      _
    %v71 = vld [vmem:[#allocation2] sm:$0xff]
    %v72 = vpack.c.bf16 %v71, %v71
    %v73 = vld [vmem:[%s1] sm:$0xf]
    %v74 = vld [vmem:[%s2] sm:$0x1]
    %v76 = vperm.slane %v74, 0
    %vm78 = vcmask 64512
    %v80 = vsel %vm78, %v72, 0
    %vm82 = vcmask 1043456
    %v84 = vsel %vm82, %v73, 0
    %86 = vmatpush.bf16.msra.mxu0 0
    %87 = vmatpush.bf16.msra.mxu0 0
    %88 = vmatpush.bf16.msra.mxu0 0
    %89 = vmatpush.bf16.msra.mxu0 0
    %90 = vmatpush.bf16.msra.mxu0 0
    %91 = vmatpush.bf16.msra.mxu0 0
    %92 = vmatpush.bf16.msra.mxu0 0
    %93 = vmatpush.bf16.msra.mxu0 %v84
    %94 = vmatmul.bf16.gmra.mxu0 %v80
    %v95 = vpop.f32.mrf.mxu0
    %v96 = vadd.f32 %v76, %v95
    %v97 = vpop.f32.mrf.mxu0
    %98 = vdwg.mxu0
    %v99 = vmax.f32 %v96, 0.0
    %v100 = vpack.c.bf16 %v99, %v99
    %v101 = vld [vmem:[%s3] sm:$0xf]
    %v102 = vld [vmem:[%s3 + $0x4] sm:$0xf]
    %v103 = vld [vmem:[%s3 + $0x8] sm:$0xf]
    %v104 = vld [vmem:[%s3 + $0xc] sm:$0xf]
    %v105 = vld [vmem:[%s3 + $0x10] sm:$0xf]
    %v106 = vld [vmem:[%s3 + $0x14] sm:$0xf]
    %v107 = vld [vmem:[%s3 + $0x18] sm:$0xf]
    %v108 = vld [vmem:[%s3 + $0x1c] sm:$0xf]
    %v109 = vld [vmem:[%s3 + $0x20] sm:$0xf]
    %v110 = vld [vmem:[%s3 + $0x24] sm:$0xf]
    %v111 = vld [vmem:[%s3 + $0x28] sm:$0xf]
    %v112 = vld [vmem:[%s3 + $0x2c] sm:$0xf]
    %v113 = vld [vmem:[%s3 + $0x30] sm:$0xf]
    %v114 = vld [vmem:[%s3 + $0x34] sm:$0xf]
    %v115 = vld [vmem:[%s3 + $0x38] sm:$0xf]
    %v116 = vld [vmem:[%s3 + $0x3c] sm:$0xf]
    %v117 = vld [vmem:[#allocation5] sm:$0x1]
    %v119 = vperm.slane %v117, 0
    %v137 = vunpack.c.l.b16 %v101
    %v138 = vunpack.c.l.b16 %v102
    %v139 = vunpack.c.l.b16 %v103
    %v140 = vunpack.c.l.b16 %v104
    %v141 = vunpack.c.l.b16 %v105
    %v142 = vunpack.c.l.b16 %v106
    %v143 = vunpack.c.l.b16 %v107
    %v144 = vunpack.c.l.b16 %v108
    %v145 = vunpack.c.l.b16 %v109
    %v146 = vunpack.c.l.b16 %v110
    %v147 = vunpack.c.l.b16 %v111
    %v148 = vunpack.c.l.b16 %v112
    %v149 = vunpack.c.l.b16 %v113
    %v150 = vunpack.c.l.b16 %v114
    %v151 = vunpack.c.l.b16 %v115
    %v152 = vunpack.c.l.b16 %v116
    %v153 = vpack.c.b16 %v138, %v137
    %v154 = vpack.c.b16 %v140, %v139
    %v155 = vpack.c.b16 %v142, %v141
    %v156 = vpack.c.b16 %v144, %v143
    %v157 = vpack.c.b16 %v146, %v145
    %v158 = vpack.c.b16 %v148, %v147
    %v159 = vpack.c.b16 %v150, %v149
    %v160 = vpack.c.b16 %v152, %v151
    %169 = vmatpush.bf16.msra.mxu0 %v160
    %170 = vmatpush.bf16.msra.mxu0 %v159
    %171 = vmatpush.bf16.msra.mxu0 %v158
    %172 = vmatpush.bf16.msra.mxu0 %v157
    %173 = vmatpush.bf16.msra.mxu0 %v156
    %174 = vmatpush.bf16.msra.mxu0 %v155
    %175 = vmatpush.bf16.msra.mxu0 %v154
    %176 = vmatpush.bf16.msra.mxu0 %v153
    %177 = vmatmul.bf16.gmra.mxu0 %v100
    %v178 = vpop.f32.mrf.mxu0
    %v179 = vadd.f32 %v119, %v178
    %v180 = vpop.f32.mrf.mxu0
    %181 = vdwg.mxu0
    %v182 = vmax.f32 %v179, 0.0
    %v183 = vpack.c.bf16 %v182, %v182
    %v184 = vld [vmem:[%s5] sm:$0xf]
    %v185 = vld [vmem:[%s5 + $0x4] sm:$0xf]
    %v186 = vld [vmem:[%s5 + $0x8] sm:$0xf]
    %v187 = vld [vmem:[%s5 + $0xc] sm:$0xf]
    %v188 = vld [vmem:[%s5 + $0x10] sm:$0xf]
    %v189 = vld [vmem:[%s5 + $0x14] sm:$0xf]
    %v190 = vld [vmem:[%s5 + $0x18] sm:$0xf]
    %v191 = vld [vmem:[%s5 + $0x1c] sm:$0xf]
    %v192 = vld [vmem:[%s5 + $0x20] sm:$0xf]
    %v193 = vld [vmem:[%s5 + $0x24] sm:$0xf]
    %v194 = vld [vmem:[%s5 + $0x28] sm:$0xf]
    %v195 = vld [vmem:[%s5 + $0x2c] sm:$0xf]
    %v196 = vld [vmem:[%s5 + $0x30] sm:$0xf]
    %v197 = vld [vmem:[%s5 + $0x34] sm:$0xf]
    %v198 = vld [vmem:[%s5 + $0x38] sm:$0xf]
    %v199 = vld [vmem:[%s5 + $0x3c] sm:$0xf]
    %v200 = vld [vmem:[#allocation7] sm:$0x1]
    %v202 = vperm.slane %v200, 0
    %v220 = vunpack.c.l.b16 %v184
    %v221 = vunpack.c.l.b16 %v185
    %v222 = vunpack.c.l.b16 %v186
    %v223 = vunpack.c.l.b16 %v187
    %v224 = vunpack.c.l.b16 %v188
    %v225 = vunpack.c.l.b16 %v189
    %v226 = vunpack.c.l.b16 %v190
    %v227 = vunpack.c.l.b16 %v191
    %v228 = vunpack.c.l.b16 %v192
    %v229 = vunpack.c.l.b16 %v193
    %v230 = vunpack.c.l.b16 %v194
    %v231 = vunpack.c.l.b16 %v195
    %v232 = vunpack.c.l.b16 %v196
    %v233 = vunpack.c.l.b16 %v197
    %v234 = vunpack.c.l.b16 %v198
    %v235 = vunpack.c.l.b16 %v199
    %v236 = vpack.c.b16 %v221, %v220
    %v237 = vpack.c.b16 %v223, %v222
    %v238 = vpack.c.b16 %v225, %v224
    %v239 = vpack.c.b16 %v227, %v226
    %v240 = vpack.c.b16 %v229, %v228
    %v241 = vpack.c.b16 %v231, %v230
    %v242 = vpack.c.b16 %v233, %v232
    %v243 = vpack.c.b16 %v235, %v234
    %252 = vmatpush.bf16.msra.mxu0 %v243
    %253 = vmatpush.bf16.msra.mxu0 %v242
    %254 = vmatpush.bf16.msra.mxu0 %v241
    %255 = vmatpush.bf16.msra.mxu0 %v240
    %256 = vmatpush.bf16.msra.mxu0 %v239
    %257 = vmatpush.bf16.msra.mxu0 %v238
    %258 = vmatpush.bf16.msra.mxu0 %v237
    %259 = vmatpush.bf16.msra.mxu0 %v236
    %260 = vmatmul.bf16.gmra.mxu0 %v183
    %v261 = vpop.f32.mrf.mxu0
    %v262 = vadd.f32 %v202, %v261
    %v263 = vpop.f32.mrf.mxu0
    %264 = vdwg.mxu0
    %vm265 = vcmask 31744
    %266 = vst.msk [vmem:[#allocation8] sm:$0xff] %vm265, %v262
    // Predicated region
    $region42: #{qnetwork_forward.1} parent=1 // pred_check
      _
    $region43: #{qnetwork_forward.1} parent=1 // pred_check_branch
      %268 = sbr.rel (0) target = $region45
    $region44: #{qnetwork_forward.1} parent=1 // pred_region
      %270 = vsyncadd [#allocation4], 96
      %s271 = sshll.u32 [#allocation8], 4
      %s272 = int_to_ptr.vmem [resolvable:$true] %s271
      %s273 = sshll.u32 %s7, 4
      %s274 = int_to_ptr.hbm [resolvable:$true] %s273
      %279 = dma.vmem_to_hbm [thread:$0]  %s272, 32, %s274, [#allocation4], 32, 32, 2
    $region45: #{qnetwork_forward.1} parent=1 // pred_fallthru
      _
    // Predicated region
    $region46: #{qnetwork_forward.1} parent=1 // pred_check
      _
    $region47: #{qnetwork_forward.1} parent=1 // pred_check_branch
      %281 = sbr.rel (0) target = $region49
    $region48: #{qnetwork_forward.1} parent=1 // pred_region
      %283 = dma.done [#allocation4], 128
    $region49: #{qnetwork_forward.1} parent=1 // pred_fallthru
      _
    %284 = vsyncpa [#allocation3], 1
    %285 = vsyncpa [#allocation6], 1
    %286 = vsyncpa [#allocation4], 1

</llo_original>
